<compile_context>
chip_gen: v5e
topology: v5e:2x2
jax: 0.10.0
libtpu: 0.0.40
codegen_flags: <defaults>
</compile_context>

<pallas_src>
import functools

import jax
import jax.numpy as jnp
from jax.experimental import pallas as pl
from jax.experimental.pallas import tpu as pltpu


def _round_up(x, m):
    return ((x + m - 1) // m) * m


def _auto_tile(B, D, itemsize):
    """Pick a batch tile as large as a conservative VMEM budget allows."""
    budget = 16 << 20                               # bytes for double-buffered xr/xi tiles
    cap = max(8, budget // (4 * D * itemsize))      # 2 inputs x 2 pipeline buffers
    if B <= 16:
        return B                                    # one tile covering the whole (tiny) batch
    if B >= 256 and cap >= 128:
        # Keep >= 2 grid steps so ("parallel",) can shard across v7x's 2 TCs,
        # and keep the tile a multiple of 128 (lane/sublane + bf16-safe).
        tm = min(2048, cap, _round_up(B // 2, 128))
        return max(128, (tm // 128) * 128)
    tm = min(2048, cap, B)
    return max(16, (tm // 16) * 16)


def _cube_policy_kernel(xr_ref, xi_ref, wr_ref, wn_ref, yr_ref):
    """yr = xr @ wr + xi @ (-wi) for one batch tile (f32 accumulation)."""
    yr = jnp.dot(xr_ref[...], wr_ref[...], preferred_element_type=jnp.float32)
    yr = yr + jnp.dot(xi_ref[...], wn_ref[...], preferred_element_type=jnp.float32)
    yr_ref[...] = yr.astype(yr_ref.dtype)


@functools.partial(jax.jit, static_argnames=("tm",))
def cube_policy_forward(xr, xi, wr, wi, *, tm=None):
    """Pallas forward: yr = xr @ wr - xi @ wi.

    xr, xi: (B, D) real/imag irrep features (f32 or bf16).
    wr, wi: (D, 1) parameters.
    Returns yr: (B, 1) float32.
    """
    B, D = xr.shape
    itemsize = jnp.dtype(xr.dtype).itemsize
    if tm is None:
        tm = _auto_tile(B, D, itemsize)

    # Fold the subtraction into the weights (free (D,1) negate in the wrapper)
    # and match the streaming dtype so the MXU sees a homogeneous matmul.
    wr_k = wr.astype(xr.dtype)
    wn_k = (-wi).astype(xr.dtype)

    grid = (pl.cdiv(B, tm),)

    # VMEM: 2 inputs x 2 pipeline buffers x (tm, D) tile + resident weights + out.
    needed = 4 * tm * D * itemsize + 4 * D * itemsize + 2 * tm * 4
    vmem_limit = int(min(max(2 * needed, 16 << 20), 40 << 20))

    cost = pl.CostEstimate(
        flops=4 * B * D,
        transcendentals=0,
        bytes_accessed=2 * B * D * itemsize + 2 * D * itemsize + 4 * B,
    )

    return pl.pallas_call(
        _cube_policy_kernel,
        out_shape=jax.ShapeDtypeStruct((B, 1), jnp.float32),
        grid_spec=pltpu.PrefetchScalarGridSpec(
            num_scalar_prefetch=0,
            grid=grid,
            in_specs=[
                pl.BlockSpec((tm, D), lambda i: (i, 0)),   # xr tile (streamed)
                pl.BlockSpec((tm, D), lambda i: (i, 0)),   # xi tile (streamed)
                pl.BlockSpec((D, 1), lambda i: (0, 0)),    # wr (VMEM-resident)
                pl.BlockSpec((D, 1), lambda i: (0, 0)),    # -wi (VMEM-resident)
            ],
            out_specs=pl.BlockSpec((tm, 1), lambda i: (i, 0)),
        ),
        compiler_params=pltpu.CompilerParams(
            dimension_semantics=("parallel",),
            vmem_limit_bytes=vmem_limit,
        ),
        cost_estimate=cost,
    )(xr, xi, wr_k, wn_k)


def reference_forward(xr, xi, wr, wi):
    return xr @ wr - xi @ wi


if __name__ == "__main__":
    STD = 0.1
    D = 128            # self.dim: total concatenated irrep feature dimension
    key = jax.random.PRNGKey(0)
    _, _, k_wr, k_wi = jax.random.split(key, 4)

    # Parameters self.wr, self.wi of shape (dim, 1).
    wr = STD * jax.random.normal(k_wr, (D, 1), dtype=jnp.float32)
    wi = STD * jax.random.normal(k_wi, (D, 1), dtype=jnp.float32)

    ok = True
    # Tiny batch (single tile) and a ragged batch (2 grid steps + clipped tail).
    for B in (8, 300):
        kb = jax.random.fold_in(key, B)
        k_xr, k_xi = jax.random.split(kb)
        xr = jax.random.normal(k_xr, (B, D), dtype=jnp.float32)
        xi = jax.random.normal(k_xi, (B, D), dtype=jnp.float32)

        yr = cube_policy_forward(xr, xi, wr, wi)
        jax.block_until_ready(yr)

        yr_ref = reference_forward(xr, xi, wr, wi)
        assert yr.shape == (B, 1)
        ok = ok and bool(jnp.allclose(yr, yr_ref, atol=2e-4, rtol=2e-4))

    assert ok, "mismatch vs reference"

    # TODO(synk): to_tensor / Cube2Irrep sparse irrep construction is host-side
    # group-theory preprocessing, not kernel compute; it is not ported here.
    print("KERNEL_OK")
</pallas_src>

<mosaic_0001>
module attributes {stable_mosaic.version = 11 : i64} {
  func.func @_cube_policy_kernel(%arg0: i32, %arg1: memref<8x128xf32, #tpu.memory_space<vmem>>, %arg2: memref<8x128xf32, #tpu.memory_space<vmem>>, %arg3: memref<128x1xf32, #tpu.memory_space<vmem>>, %arg4: memref<128x1xf32, #tpu.memory_space<vmem>>, %arg5: memref<8x1xf32, #tpu.memory_space<vmem>>) attributes {dimension_semantics = [#tpu.dimension_semantics<parallel>], iteration_bounds = array<i64: 1>, scalar_prefetch = 0 : i64, scratch_operands = 0 : i64, tpu.core_type = #tpu.core_type<tc>, window_params = [{transform_indices = @transform_0, window_bounds = array<i64: 8, 128>}, {transform_indices = @transform_1, window_bounds = array<i64: 8, 128>}, {pipeline_mode = #tpu.pipeline_mode<synchronous>, transform_indices = @transform_2, window_bounds = array<i64: 128, 1>}, {pipeline_mode = #tpu.pipeline_mode<synchronous>, transform_indices = @transform_3, window_bounds = array<i64: 128, 1>}, {transform_indices = @transform_4, window_bounds = array<i64: 8, 1>}]} {
    %c0 = arith.constant 0 : index
    %c0_0 = arith.constant 0 : index
    %0 = vector.load %arg1[%c0, %c0_0] : memref<8x128xf32, #tpu.memory_space<vmem>>, vector<8x128xf32>
    %c0_1 = arith.constant 0 : index
    %c0_2 = arith.constant 0 : index
    %1 = vector.load %arg3[%c0_1, %c0_2] : memref<128x1xf32, #tpu.memory_space<vmem>>, vector<128x1xf32>
    %cst = arith.constant dense<0.000000e+00> : vector<8x1xf32>
    %2 = tpu.matmul %0, %1, %cst {dimension_numbers = #tpu.dot_dimension_numbers<[1], [0], [0], [1], [0, 0, 1, 1], [], []>} : vector<8x128xf32>, vector<128x1xf32>, vector<8x1xf32> -> vector<8x1xf32>
    %c0_3 = arith.constant 0 : index
    %c0_4 = arith.constant 0 : index
    %3 = vector.load %arg2[%c0_3, %c0_4] : memref<8x128xf32, #tpu.memory_space<vmem>>, vector<8x128xf32>
    %c0_5 = arith.constant 0 : index
    %c0_6 = arith.constant 0 : index
    %4 = vector.load %arg4[%c0_5, %c0_6] : memref<128x1xf32, #tpu.memory_space<vmem>>, vector<128x1xf32>
    %cst_7 = arith.constant dense<0.000000e+00> : vector<8x1xf32>
    %5 = tpu.matmul %3, %4, %cst_7 {dimension_numbers = #tpu.dot_dimension_numbers<[1], [0], [0], [1], [0, 0, 1, 1], [], []>} : vector<8x128xf32>, vector<128x1xf32>, vector<8x1xf32> -> vector<8x1xf32>
    %6 = arith.addf %2, %5 : vector<8x1xf32>
    %c0_8 = arith.constant 0 : index
    %c0_9 = arith.constant 0 : index
    %7 = vector.load %arg5[%c0_8, %c0_9] : memref<8x1xf32, #tpu.memory_space<vmem>>, vector<8x1xf32>
    tpu.vector_store %arg5[%c0_8, %c0_9], %6 {strides = array<i32>} : memref<8x1xf32, #tpu.memory_space<vmem>>, vector<8x1xf32>,
    return
  }
  func.func @transform_0(%arg0: i32) -> (i32, i32) {
    %c0_i32 = arith.constant 0 : i32
    %c0_i32_0 = arith.constant 0 : i32
    return %arg0, %c0_i32 : i32, i32
  }
  func.func @transform_1(%arg0: i32) -> (i32, i32) {
    %c0_i32 = arith.constant 0 : i32
    %c0_i32_0 = arith.constant 0 : i32
    return %arg0, %c0_i32 : i32, i32
  }
  func.func @transform_2(%arg0: i32) -> (i32, i32) {
    %c0_i32 = arith.constant 0 : i32
    %c0_i32_0 = arith.constant 0 : i32
    %c0_i32_1 = arith.constant 0 : i32
    return %c0_i32, %c0_i32_0 : i32, i32
  }
  func.func @transform_3(%arg0: i32) -> (i32, i32) {
    %c0_i32 = arith.constant 0 : i32
    %c0_i32_0 = arith.constant 0 : i32
    %c0_i32_1 = arith.constant 0 : i32
    return %c0_i32, %c0_i32_0 : i32, i32
  }
  func.func @transform_4(%arg0: i32) -> (i32, i32) {
    %c0_i32 = arith.constant 0 : i32
    %c0_i32_0 = arith.constant 0 : i32
    return %arg0, %c0_i32 : i32, i32
  }
}

</mosaic_0001>

<llo_original>
// kernel: neg.1
$region0: #{neg.1}
  #allocation0 [shape = 's32[1]{0}', space=sflag, size = 0x4, scoped, tag = 'scoped memory for neg.1']
  %s0 = inlined_call_operand.vmem [shape: f32[128,1], index: 0, kind: input, shape index: {}]
  %s1 = inlined_call_operand.vmem [shape: f32[128,1], index: 1, kind: output, shape index: {}]
  %v2 = vld [vmem:[%s0] sm:$0x1]
  %3 = xla_tuple %v2
  %4 = xla_tuple %3
  %v5 = vxor.u32 %v2, 2147483648
  %6 = xla_tuple %v5
  %7 = vst [vmem:[%s1] sm:$0x1] %v5

// kernel: cube_policy_forward.1
$region0: #{cube_policy_forward.1}
  #allocation0 [shape = 'u32[]', space=smem, size = 0x4, offset = 0x4, fixed_abs, tag = 'smem constant byte address 0x4 - core index']
  #allocation1 [shape = 'u32[72,128]{1,0:T(1,128)}', space=vmem, size = 0x9000, scoped, tag = 'internal scratch']
  %s0 = inlined_call_operand.vmem [shape: f32[8,128], index: 0, kind: input, shape index: {}]
  %s1 = inlined_call_operand.vmem [shape: f32[8,128], index: 1, kind: input, shape index: {}]
  %s2 = inlined_call_operand.vmem [shape: f32[128,1], index: 2, kind: input, shape index: {}]
  %s3 = inlined_call_operand.vmem [shape: f32[128,1], index: 3, kind: input, shape index: {}]
  %s4 = inlined_call_operand.vmem [shape: f32[8,1], index: 4, kind: output, shape index: {}]
  %s5 = sld [smem:[#allocation0]]
  $region26: #{cube_policy_forward.1} parent=0
    _
  %s7 = ssub.s32 1, %s5
  %s8 = scalar_select 0, %s7, %s5
  // Predicated region
  $region2: #{cube_policy_forward.1} parent=0 // pred_check
    _
  $region3: #{cube_policy_forward.1} parent=0 // pred_check_branch
    %10 = sbr.rel (0) target = $region5
  $region4: #{cube_policy_forward.1} parent=0 // pred_region
    _
  $region5: #{cube_policy_forward.1} parent=0 // pred_fallthru
    _
  // Predicated region
  $region6: #{cube_policy_forward.1} parent=0 // pred_check
    _
  $region7: #{cube_policy_forward.1} parent=0 // pred_check_branch
    %12 = sbr.rel (0) target = $region9
  $region8: #{cube_policy_forward.1} parent=0 // pred_region
    _
  $region9: #{cube_policy_forward.1} parent=0 // pred_fallthru
    _
  // Predicated region
  $region10: #{cube_policy_forward.1} parent=0 // pred_check
    _
  $region11: #{cube_policy_forward.1} parent=0 // pred_check_branch
    %14 = sbr.rel (0) target = $region13
  $region12: #{cube_policy_forward.1} parent=0 // pred_region
    _
  $region13: #{cube_policy_forward.1} parent=0 // pred_fallthru
    _
  // Predicated region
  $region14: #{cube_policy_forward.1} parent=0 // pred_check
    _
  $region15: #{cube_policy_forward.1} parent=0 // pred_check_branch
    %16 = sbr.rel (0) target = $region17
  $region16: #{cube_policy_forward.1} parent=0 // pred_region
    _
  $region17: #{cube_policy_forward.1} parent=0 // pred_fallthru
    _
  %v17 = vld [vmem:[%s0] sm:$0xff]
  %v18 = vld [vmem:[%s2] sm:$0xff]
  %v19 = vld [vmem:[%s2 + $0x8] sm:$0xff]
  %v20 = vld [vmem:[%s2 + $0x10] sm:$0xff]
  %v21 = vld [vmem:[%s2 + $0x18] sm:$0xff]
  %v22 = vld [vmem:[%s2 + $0x20] sm:$0xff]
  %v23 = vld [vmem:[%s2 + $0x28] sm:$0xff]
  %v24 = vld [vmem:[%s2 + $0x30] sm:$0xff]
  %v25 = vld [vmem:[%s2 + $0x38] sm:$0xff]
  %v26 = vld [vmem:[%s2 + $0x40] sm:$0xff]
  %v27 = vld [vmem:[%s2 + $0x48] sm:$0xff]
  %v28 = vld [vmem:[%s2 + $0x50] sm:$0xff]
  %v29 = vld [vmem:[%s2 + $0x58] sm:$0xff]
  %v30 = vld [vmem:[%s2 + $0x60] sm:$0xff]
  %v31 = vld [vmem:[%s2 + $0x68] sm:$0xff]
  %v32 = vld [vmem:[%s2 + $0x70] sm:$0xff]
  %v33 = vld [vmem:[%s2 + $0x78] sm:$0xff]
  %v34 = vld [vmem:[%s1] sm:$0xff]
  %v35 = vld [vmem:[%s3] sm:$0xff]
  %v36 = vld [vmem:[%s3 + $0x8] sm:$0xff]
  %v37 = vld [vmem:[%s3 + $0x10] sm:$0xff]
  %v38 = vld [vmem:[%s3 + $0x18] sm:$0xff]
  %v39 = vld [vmem:[%s3 + $0x20] sm:$0xff]
  %v40 = vld [vmem:[%s3 + $0x28] sm:$0xff]
  %v41 = vld [vmem:[%s3 + $0x30] sm:$0xff]
  %v42 = vld [vmem:[%s3 + $0x38] sm:$0xff]
  %v43 = vld [vmem:[%s3 + $0x40] sm:$0xff]
  %v44 = vld [vmem:[%s3 + $0x48] sm:$0xff]
  %v45 = vld [vmem:[%s3 + $0x50] sm:$0xff]
  %v46 = vld [vmem:[%s3 + $0x58] sm:$0xff]
  %v47 = vld [vmem:[%s3 + $0x60] sm:$0xff]
  %v48 = vld [vmem:[%s3 + $0x68] sm:$0xff]
  %v49 = vld [vmem:[%s3 + $0x70] sm:$0xff]
  %v50 = vld [vmem:[%s3 + $0x78] sm:$0xff]
  %51 = vmatpush.msra.mxu0 %v50
  %52 = vmatpush.msra.mxu0 %v49
  %53 = vmatpush.msra.mxu0 %v48
  %54 = vmatpush.msra.mxu0 %v47
  %55 = vmatpush.msra.mxu0 %v46
  %56 = vmatpush.msra.mxu0 %v45
  %57 = vmatpush.msra.mxu0 %v44
  %58 = vmatpush.msra.mxu0 %v43
  %59 = vmatpush.msra.mxu0 %v42
  %60 = vmatpush.msra.mxu0 %v41
  %61 = vmatpush.msra.mxu0 %v40
  %62 = vmatpush.msra.mxu0 %v39
  %63 = vmatpush.msra.mxu0 %v38
  %64 = vmatpush.msra.mxu0 %v37
  %65 = vmatpush.msra.mxu0 %v36
  %66 = vmatpush.msra.mxu0 %v35
  %67 = vmatmul.f32.gmra.mxu0 %v34
  %v68 = vpop.f32.mrf.mxu0
  %v69 = vadd.f32 0.0, %v68
  %70 = vdwg.mxu0
  %71 = vmatpush.msra.mxu0 %v33
  %72 = vmatpush.msra.mxu0 %v32
  %73 = vmatpush.msra.mxu0 %v31
  %74 = vmatpush.msra.mxu0 %v30
  %75 = vmatpush.msra.mxu0 %v29
  %76 = vmatpush.msra.mxu0 %v28
  %77 = vmatpush.msra.mxu0 %v27
  %78 = vmatpush.msra.mxu0 %v26
  %79 = vmatpush.msra.mxu0 %v25
  %80 = vmatpush.msra.mxu0 %v24
  %81 = vmatpush.msra.mxu0 %v23
  %82 = vmatpush.msra.mxu0 %v22
  %83 = vmatpush.msra.mxu0 %v21
  %84 = vmatpush.msra.mxu0 %v20
  %85 = vmatpush.msra.mxu0 %v19
  %86 = vmatpush.msra.mxu0 %v18
  %87 = vmatmul.f32.gmra.mxu0 %v17
  %v88 = vpop.f32.mrf.mxu0
  %v89 = vadd.f32 %v69, %v88
  %90 = vdwg.mxu0
  %vm91 = vcmask 7168
  %92 = vst.msk [vmem:[%s4] sm:$0xff] %vm91, %v89
  // Predicated region
  $region18: #{cube_policy_forward.1} parent=0 // pred_check
    _
  $region19: #{cube_policy_forward.1} parent=0 // pred_check_branch
    %94 = sbr.rel (0) target = $region21
  $region20: #{cube_policy_forward.1} parent=0 // pred_region
    _
  $region21: #{cube_policy_forward.1} parent=0 // pred_fallthru
    _
  // Predicated region
  $region22: #{cube_policy_forward.1} parent=0 // pred_check
    _
  $region23: #{cube_policy_forward.1} parent=0 // pred_check_branch
    %96 = sbr.rel (0) target = $region25
  $region24: #{cube_policy_forward.1} parent=0 // pred_region
    _
  $region25: #{cube_policy_forward.1} parent=0 // pred_fallthru
    _

</llo_original>
